<compile_context>
chip_gen: v6e
topology: v6e:2x2x1
jax: 0.10.0
libtpu: 0.0.40
codegen_flags: <defaults>
</compile_context>

<pallas_src>
import functools

import jax
import jax.numpy as jnp
from jax.experimental import pallas as pl
from jax.experimental.pallas import tpu as pltpu

C_PAD = 128   # lane-dense padded conv output channels
NC_PAD = 128  # lane-dense padded number of classes


# ----------------------------------------------------------------------------
# Fused kernel: conv3x3(same) + bias + ReLU  ->  GAP accumulate  ->  classifier
# ----------------------------------------------------------------------------
def _fused_conv_gap_fc_kernel(y_ref, w_ref, cb_ref, fcw_ref, fcb_ref,
                              feat_ref, logits_ref, pool_ref,
                              *, tm, w_out, inv_hw):
    # y_ref     : (1, (H+2)*W, KP)   bf16  kx-shift folded into channels, flattened spatially
    # w_ref     : (3, KP, C_PAD)     bf16  conv weights grouped by ky
    # cb_ref    : (1, C_PAD)         f32   conv bias
    # fcw_ref   : (C_PAD, NC_PAD)    bf16  classifier weights
    # fcb_ref   : (1, NC_PAD)        f32   classifier bias
    # feat_ref  : (1, TM, C_PAD)     bf16  conv+ReLU feature tile (GradCAM hook output)
    # logits_ref: (1, 1, NC_PAD)     f32   logits (written at last M step per batch)
    # pool_ref  : (1, C_PAD)         f32   running GAP accumulator (scratch)
    m = pl.program_id(1)
    n_m = pl.num_programs(1)

    @pl.when(m == 0)
    def _():
        pool_ref[...] = jnp.zeros_like(pool_ref)

    base = pl.multiple_of(m * tm, tm)

    # conv as a sum of 3 row(ky)-shifted matmuls on the MXU (f32 accumulation).
    lhs0 = y_ref[0, pl.ds(base, tm), :]                       # (TM, KP) bf16
    acc = jnp.dot(lhs0, w_ref[0], preferred_element_type=jnp.float32)
    for ky in (1, 2):
        lhs = y_ref[0, pl.ds(base + ky * w_out, tm), :]       # (TM, KP) bf16
        acc = acc + jnp.dot(lhs, w_ref[ky], preferred_element_type=jnp.float32)

    # epilogue in f32 (v5e has no bf16 VPU path)
    acc = acc + cb_ref[...]
    relu = jnp.maximum(acc, 0.0)                              # (TM, C_PAD) f32
    relu_bf16 = relu.astype(jnp.bfloat16)
    feat_ref[0] = relu_bf16                                   # lane-dense bf16 store

    # GAP partial sum as a ones-row matmul (MXU) instead of an XLU sublane reduce.
    ones_row = jnp.ones((1, tm), jnp.bfloat16)
    pool_ref[...] += jnp.dot(ones_row, relu_bf16, preferred_element_type=jnp.float32)

    @pl.when(m == n_m - 1)
    def _():
        pooled = (pool_ref[...] * inv_hw).astype(jnp.bfloat16)        # (1, C_PAD)
        logits = jnp.dot(pooled, fcw_ref[...], preferred_element_type=jnp.float32)
        logits_ref[0] = logits + fcb_ref[...]                          # (1, NC_PAD) f32


@functools.partial(jax.jit, static_argnames=("tm",))
def gradcam_backbone_forward(x_nchw, conv_w, conv_b, fc_w, fc_b, *, tm=128):
    """x_nchw: [B, Cin, H, W] f32.  Returns (feat_nhwc[B,H,W,Cout] bf16, logits[B,NC] f32)."""
    B, Cin, H, W = x_nchw.shape
    Cout = conv_w.shape[0]
    NC = fc_w.shape[1]
    assert (H * W) % tm == 0 and tm % 8 == 0
    K = 3 * Cin
    KP = ((K + 7) // 8) * 8                                   # sublane-align the matmul K dim

    # --- layout prep (cheap glue; ~3x input inflation instead of im2col's 9x) ---
    x_nhwc = jnp.transpose(x_nchw, (0, 2, 3, 1)).astype(jnp.bfloat16)
    x_pad = jnp.pad(x_nhwc, ((0, 0), (1, 1), (1, 1), (0, 0)))
    # y[b, p*W + w, kx*Cin + c] = x_pad[b, p, w + kx, c]
    y = jnp.concatenate([x_pad[:, :, kx:kx + W, :] for kx in range(3)], axis=-1)
    y = y.reshape(B, (H + 2) * W, K)
    y = jnp.pad(y, ((0, 0), (0, 0), (0, KP - K)))

    # conv weights: (Cout, Cin, 3, 3) -> (ky, kx*Cin + cin, Cout), zero-padded to (3, KP, C_PAD)
    w_rows = jnp.transpose(conv_w, (2, 3, 1, 0)).reshape(3, K, Cout)
    w_rows = jnp.pad(w_rows, ((0, 0), (0, KP - K), (0, C_PAD - Cout))).astype(jnp.bfloat16)
    cb = jnp.pad(conv_b, (0, C_PAD - Cout)).reshape(1, C_PAD).astype(jnp.float32)

    fcw = jnp.pad(fc_w, ((0, C_PAD - Cout), (0, NC_PAD - NC))).astype(jnp.bfloat16)
    fcb = jnp.pad(fc_b, (0, NC_PAD - NC)).reshape(1, NC_PAD).astype(jnp.float32)

    n_m = (H * W) // tm
    kernel = functools.partial(_fused_conv_gap_fc_kernel,
                               tm=tm, w_out=W, inv_hw=1.0 / float(H * W))

    # TODO(synk): the per-batch input block keeps the whole (tiny) image resident;
    # for large H*W this would switch to halo-tiled M blocking of the input.
    feat_flat, logits_pad = pl.pallas_call(
        kernel,
        out_shape=(
            jax.ShapeDtypeStruct((B, H * W, C_PAD), jnp.bfloat16),
            jax.ShapeDtypeStruct((B, 1, NC_PAD), jnp.float32),
        ),
        grid=(B, n_m),
        in_specs=[
            pl.BlockSpec((1, (H + 2) * W, KP), lambda b, m: (b, 0, 0)),
            pl.BlockSpec((3, KP, C_PAD), lambda b, m: (0, 0, 0)),
            pl.BlockSpec((1, C_PAD), lambda b, m: (0, 0)),
            pl.BlockSpec((C_PAD, NC_PAD), lambda b, m: (0, 0)),
            pl.BlockSpec((1, NC_PAD), lambda b, m: (0, 0)),
        ],
        out_specs=(
            pl.BlockSpec((1, tm, C_PAD), lambda b, m: (b, m, 0)),
            pl.BlockSpec((1, 1, NC_PAD), lambda b, m: (b, 0, 0)),
        ),
        scratch_shapes=[pltpu.VMEM((1, C_PAD), jnp.float32)],
        compiler_params=pltpu.CompilerParams(
            dimension_semantics=("parallel", "arbitrary"),
            vmem_limit_bytes=32 * 1024 * 1024,
        ),
    )(y, w_rows, cb, fcw, fcb)

    feat = feat_flat.reshape(B, H, W, C_PAD)[..., :Cout]      # NHWC, bf16
    logits = logits_pad.reshape(B, NC_PAD)[:, :NC]            # f32
    return feat, logits


# ----------------------------------------------------------------------------
# GradCAM_CNN equivalent
# ----------------------------------------------------------------------------
class GradCAMCNNPallas:
    """Mirrors GradCAM_CNN: wraps a model, records feature maps on forward."""

    def __init__(self, c_in=4, c_mid=8, num_classes=10, seed=0):
        k1, k2, k3, k4 = jax.random.split(jax.random.PRNGKey(seed), 4)
        # conv: [Cout, Cin, 3, 3] (PyTorch layout)
        self.conv_w = jax.random.normal(k1, (c_mid, c_in, 3, 3), jnp.float32) * 0.1
        self.conv_b = jax.random.normal(k2, (c_mid,), jnp.float32) * 0.01
        # linear: stored as [C_mid, num_classes]
        self.fc_w = jax.random.normal(k3, (c_mid, num_classes), jnp.float32) * 0.1
        self.fc_b = jax.random.normal(k4, (num_classes,), jnp.float32) * 0.01
        # GradCAM bookkeeping (forward-observable part = feature_maps)
        self.gradients = []   # TODO(synk): backward-hook gradient capture has no forward-only Pallas equivalent
        self.feature_maps = []

    def get_feature_gradients(self, feature_layer=None):
        idx = 0 if feature_layer is None else feature_layer
        return self.gradients[idx]

    def get_feature_maps(self, x=None, feature_layer=None):
        idx = len(self.feature_maps) - 1
        if feature_layer is not None:
            idx = len(self.feature_maps) - feature_layer - 1
        return self.feature_maps[idx]

    def get_num_featuremaps(self):
        return len(self.feature_maps)

    def reset(self):
        # TODO(synk): original also calls self.zero_grad(); no autograd state kept here.
        self.gradients = []
        self.feature_maps = []

    def forward(self, x):
        feat_nhwc, logits = gradcam_backbone_forward(
            x, self.conv_w, self.conv_b, self.fc_w, self.fc_b)
        # feature_hook equivalent (stored in PyTorch NCHW / f32).
        # NOTE: Python-list side effect; if jitting forward end-to-end, return feat instead.
        self.feature_maps.append(
            jnp.transpose(feat_nhwc.astype(jnp.float32), (0, 3, 1, 2)))
        return logits

    __call__ = forward


# ----------------------------------------------------------------------------
# Pure-JAX f32 reference for a tolerance check (bf16 kernel vs f32 reference)
# ----------------------------------------------------------------------------
def _reference_forward(x_nchw, conv_w, conv_b, fc_w, fc_b):
    x = jnp.transpose(x_nchw, (0, 2, 3, 1))                   # NHWC
    w_hwio = jnp.transpose(conv_w, (2, 3, 1, 0))              # HWIO
    feat = jax.lax.conv_general_dilated(
        x, w_hwio, window_strides=(1, 1), padding="SAME",
        dimension_numbers=("NHWC", "HWIO", "NHWC"))
    feat = jnp.maximum(feat + conv_b, 0.0)
    pooled = feat.mean(axis=(1, 2))
    return feat, pooled @ fc_w + fc_b


if __name__ == "__main__":
    key = jax.random.PRNGKey(0)
    x = jax.random.normal(key, (2, 4, 16, 16), jnp.float32)   # NCHW

    model = GradCAMCNNPallas(c_in=4, c_mid=8, num_classes=10, seed=0)
    out = model(x)
    out = jax.block_until_ready(out)

    assert out.shape == (2, 10), out.shape
    assert model.get_num_featuremaps() == 1
    fmap = model.get_feature_maps(x)
    assert fmap.shape == (2, 8, 16, 16), fmap.shape
    assert bool(jnp.all(jnp.isfinite(out)))

    # correctness vs pure-JAX f32 reference (bf16 matmul operands -> loose tolerance)
    feat_ref, logits_ref = _reference_forward(
        x, model.conv_w, model.conv_b, model.fc_w, model.fc_b)
    feat_nchw_ref = jnp.transpose(feat_ref, (0, 3, 1, 2))
    assert bool(jnp.allclose(out, logits_ref, atol=2e-2, rtol=5e-2))
    assert bool(jnp.allclose(fmap, feat_nchw_ref, atol=5e-2, rtol=1e-1))

    print("KERNEL_OK")
</pallas_src>

<mosaic_0001>
module attributes {stable_mosaic.version = 11 : i64} {
  func.func @_fused_conv_gap_fc_kernel(%arg0: i32, %arg1: i32, %arg2: memref<1x288x16xbf16, #tpu.memory_space<vmem>>, %arg3: memref<3x16x128xbf16, #tpu.memory_space<vmem>>, %arg4: memref<1x128xf32, #tpu.memory_space<vmem>>, %arg5: memref<128x128xbf16, #tpu.memory_space<vmem>>, %arg6: memref<1x128xf32, #tpu.memory_space<vmem>>, %arg7: memref<1x128x128xbf16, #tpu.memory_space<vmem>>, %arg8: memref<1x1x128xf32, #tpu.memory_space<vmem>>, %arg9: memref<1x128xf32, #tpu.memory_space<vmem>>) attributes {dimension_semantics = [#tpu.dimension_semantics<parallel>, #tpu.dimension_semantics<arbitrary>], iteration_bounds = array<i64: 2, 2>, scalar_prefetch = 0 : i64, scratch_operands = 1 : i64, tpu.core_type = #tpu.core_type<tc>, window_params = [{transform_indices = @transform_0, window_bounds = array<i64: 1, 288, 16>}, {pipeline_mode = #tpu.pipeline_mode<synchronous>, transform_indices = @transform_1, window_bounds = array<i64: 3, 16, 128>}, {pipeline_mode = #tpu.pipeline_mode<synchronous>, transform_indices = @transform_2, window_bounds = array<i64: 1, 128>}, {pipeline_mode = #tpu.pipeline_mode<synchronous>, transform_indices = @transform_3, window_bounds = array<i64: 128, 128>}, {pipeline_mode = #tpu.pipeline_mode<synchronous>, transform_indices = @transform_4, window_bounds = array<i64: 1, 128>}, {transform_indices = @transform_5, window_bounds = array<i64: 1, 128, 128>}, {transform_indices = @transform_6, window_bounds = array<i64: 1, 1, 128>}]} {
    %c0_i32 = arith.constant 0 : i32
    %0 = arith.cmpi eq, %arg1, %c0_i32 : i32
    %1 = arith.extui %0 : i1 to i32
    %c0_i32_0 = arith.constant 0 : i32
    %2 = arith.cmpi ne, %1, %c0_i32_0 : i32
    scf.if %2 {
      %cst_28 = arith.constant 0.000000e+00 : f32
      %44 = vector.broadcast %cst_28 : f32 to vector<1x128xf32>
      %c0_29 = arith.constant 0 : index
      %c0_30 = arith.constant 0 : index
      %45 = vector.load %arg9[%c0_29, %c0_30] : memref<1x128xf32, #tpu.memory_space<vmem>>, vector<1x128xf32>
      tpu.vector_store %arg9[%c0_29, %c0_30], %44 {strides = array<i32>} : memref<1x128xf32, #tpu.memory_space<vmem>>, vector<1x128xf32>,
    } else {
    }
    %c128_i32 = arith.constant 128 : i32
    %3 = arith.muli %arg1, %c128_i32 : i32
    %4 = tpu.assume_multiple %3, 128 : i32
    %c0 = arith.constant 0 : index
    %5 = arith.index_cast %4 : i32 to index
    %c0_1 = arith.constant 0 : index
    %6 = vector.load %arg2[%c0, %5, %c0_1] : memref<1x288x16xbf16, #tpu.memory_space<vmem>>, vector<1x128x16xbf16>
    %7 = vector.shape_cast %6 : vector<1x128x16xbf16> to vector<128x16xbf16>
    %c0_2 = arith.constant 0 : index
    %c0_3 = arith.constant 0 : index
    %c0_4 = arith.constant 0 : index
    %8 = vector.load %arg3[%c0_2, %c0_3, %c0_4] : memref<3x16x128xbf16, #tpu.memory_space<vmem>>, vector<1x16x128xbf16>
    %9 = vector.shape_cast %8 : vector<1x16x128xbf16> to vector<16x128xbf16>
    %cst = arith.constant dense<0.000000e+00> : vector<128x128xf32>
    %10 = tpu.matmul %7, %9, %cst {dimension_numbers = #tpu.dot_dimension_numbers<[1], [0], [0], [1], [0, 0, 1, 1], [], []>} : vector<128x16xbf16>, vector<16x128xbf16>, vector<128x128xf32> -> vector<128x128xf32>
    %c16_i32 = arith.constant 16 : i32
    %11 = arith.addi %4, %c16_i32 : i32
    %c0_5 = arith.constant 0 : index
    %12 = arith.index_cast %11 : i32 to index
    %c0_6 = arith.constant 0 : index
    %13 = vector.load %arg2[%c0_5, %12, %c0_6] : memref<1x288x16xbf16, #tpu.memory_space<vmem>>, vector<1x128x16xbf16>
    %14 = vector.shape_cast %13 : vector<1x128x16xbf16> to vector<128x16xbf16>
    %c1 = arith.constant 1 : index
    %c0_7 = arith.constant 0 : index
    %c0_8 = arith.constant 0 : index
    %15 = vector.load %arg3[%c1, %c0_7, %c0_8] : memref<3x16x128xbf16, #tpu.memory_space<vmem>>, vector<1x16x128xbf16>
    %16 = vector.shape_cast %15 : vector<1x16x128xbf16> to vector<16x128xbf16>
    %cst_9 = arith.constant dense<0.000000e+00> : vector<128x128xf32>
    %17 = tpu.matmul %14, %16, %cst_9 {dimension_numbers = #tpu.dot_dimension_numbers<[1], [0], [0], [1], [0, 0, 1, 1], [], []>} : vector<128x16xbf16>, vector<16x128xbf16>, vector<128x128xf32> -> vector<128x128xf32>
    %18 = arith.addf %10, %17 : vector<128x128xf32>
    %c32_i32 = arith.constant 32 : i32
    %19 = arith.addi %4, %c32_i32 : i32
    %c0_10 = arith.constant 0 : index
    %20 = arith.index_cast %19 : i32 to index
    %c0_11 = arith.constant 0 : index
    %21 = vector.load %arg2[%c0_10, %20, %c0_11] : memref<1x288x16xbf16, #tpu.memory_space<vmem>>, vector<1x128x16xbf16>
    %22 = vector.shape_cast %21 : vector<1x128x16xbf16> to vector<128x16xbf16>
    %c2 = arith.constant 2 : index
    %c0_12 = arith.constant 0 : index
    %c0_13 = arith.constant 0 : index
    %23 = vector.load %arg3[%c2, %c0_12, %c0_13] : memref<3x16x128xbf16, #tpu.memory_space<vmem>>, vector<1x16x128xbf16>
    %24 = vector.shape_cast %23 : vector<1x16x128xbf16> to vector<16x128xbf16>
    %cst_14 = arith.constant dense<0.000000e+00> : vector<128x128xf32>
    %25 = tpu.matmul %22, %24, %cst_14 {dimension_numbers = #tpu.dot_dimension_numbers<[1], [0], [0], [1], [0, 0, 1, 1], [], []>} : vector<128x16xbf16>, vector<16x128xbf16>, vector<128x128xf32> -> vector<128x128xf32>
    %26 = arith.addf %18, %25 : vector<128x128xf32>
    %c0_15 = arith.constant 0 : index
    %c0_16 = arith.constant 0 : index
    %27 = vector.load %arg4[%c0_15, %c0_16] : memref<1x128xf32, #tpu.memory_space<vmem>>, vector<1x128xf32>
    %28 = vector.broadcast %27 : vector<1x128xf32> to vector<128x128xf32>
    %29 = arith.addf %26, %28 : vector<128x128xf32>
    %cst_17 = arith.constant 0.000000e+00 : f32
    %30 = vector.broadcast %cst_17 : f32 to vector<128x128xf32>
    %31 = arith.maximumf %29, %30 : vector<128x128xf32>
    %32 = arith.truncf %31 : vector<128x128xf32> to vector<128x128xbf16>
    %c0_18 = arith.constant 0 : index
    %c0_19 = arith.constant 0 : index
    %c0_20 = arith.constant 0 : index
    %33 = vector.load %arg7[%c0_18, %c0_19, %c0_20] : memref<1x128x128xbf16, #tpu.memory_space<vmem>>, vector<1x128x128xbf16>
    %34 = vector.shape_cast %33 : vector<1x128x128xbf16> to vector<128x128xbf16>
    %35 = vector.shape_cast %32 : vector<128x128xbf16> to vector<1x128x128xbf16>
    tpu.vector_store %arg7[%c0_18, %c0_19, %c0_20], %35 {strides = array<i32>} : memref<1x128x128xbf16, #tpu.memory_space<vmem>>, vector<1x128x128xbf16>,
    %cst_21 = arith.constant 1.000000e+00 : bf16
    %36 = vector.broadcast %cst_21 : bf16 to vector<1x128xbf16>
    %c0_22 = arith.constant 0 : index
    %c0_23 = arith.constant 0 : index
    %37 = vector.load %arg9[%c0_22, %c0_23] : memref<1x128xf32, #tpu.memory_space<vmem>>, vector<1x128xf32>
    %cst_24 = arith.constant dense<0.000000e+00> : vector<1x128xf32>
    %38 = tpu.matmul %36, %32, %cst_24 {dimension_numbers = #tpu.dot_dimension_numbers<[1], [0], [0], [1], [0, 0, 1, 1], [], []>} : vector<1x128xbf16>, vector<128x128xbf16>, vector<1x128xf32> -> vector<1x128xf32>
    %39 = arith.addf %37, %38 : vector<1x128xf32>
    %c0_25 = arith.constant 0 : index
    %c0_26 = arith.constant 0 : index
    %40 = vector.load %arg9[%c0_25, %c0_26] : memref<1x128xf32, #tpu.memory_space<vmem>>, vector<1x128xf32>
    tpu.vector_store %arg9[%c0_25, %c0_26], %39 {strides = array<i32>} : memref<1x128xf32, #tpu.memory_space<vmem>>, vector<1x128xf32>,
    %c1_i32 = arith.constant 1 : i32
    %41 = arith.cmpi eq, %arg1, %c1_i32 : i32
    %42 = arith.extui %41 : i1 to i32
    %c0_i32_27 = arith.constant 0 : i32
    %43 = arith.cmpi ne, %42, %c0_i32_27 : i32
    scf.if %43 {
      %c0_28 = arith.constant 0 : index
      %c0_29 = arith.constant 0 : index
      %44 = vector.load %arg9[%c0_28, %c0_29] : memref<1x128xf32, #tpu.memory_space<vmem>>, vector<1x128xf32>
      %cst_30 = arith.constant 3.906250e-03 : f32
      %45 = vector.broadcast %cst_30 : f32 to vector<1x128xf32>
      %46 = arith.mulf %44, %45 : vector<1x128xf32>
      %47 = arith.truncf %46 : vector<1x128xf32> to vector<1x128xbf16>
      %c0_31 = arith.constant 0 : index
      %c0_32 = arith.constant 0 : index
      %48 = vector.load %arg5[%c0_31, %c0_32] : memref<128x128xbf16, #tpu.memory_space<vmem>>, vector<128x128xbf16>
      %cst_33 = arith.constant dense<0.000000e+00> : vector<1x128xf32>
      %49 = tpu.matmul %47, %48, %cst_33 {dimension_numbers = #tpu.dot_dimension_numbers<[1], [0], [0], [1], [0, 0, 1, 1], [], []>} : vector<1x128xbf16>, vector<128x128xbf16>, vector<1x128xf32> -> vector<1x128xf32>
      %c0_34 = arith.constant 0 : index
      %c0_35 = arith.constant 0 : index
      %50 = vector.load %arg6[%c0_34, %c0_35] : memref<1x128xf32, #tpu.memory_space<vmem>>, vector<1x128xf32>
      %51 = arith.addf %49, %50 : vector<1x128xf32>
      %c0_36 = arith.constant 0 : index
      %c0_37 = arith.constant 0 : index
      %c0_38 = arith.constant 0 : index
      %52 = vector.load %arg8[%c0_36, %c0_37, %c0_38] : memref<1x1x128xf32, #tpu.memory_space<vmem>>, vector<1x1x128xf32>
      %53 = vector.shape_cast %52 : vector<1x1x128xf32> to vector<1x128xf32>
      %54 = vector.shape_cast %51 : vector<1x128xf32> to vector<1x1x128xf32>
      tpu.vector_store %arg8[%c0_36, %c0_37, %c0_38], %54 {strides = array<i32>} : memref<1x1x128xf32, #tpu.memory_space<vmem>>, vector<1x1x128xf32>,
    } else {
    }
    return
  }
  func.func @transform_0(%arg0: i32, %arg1: i32) -> (i32, i32, i32) {
    %c0_i32 = arith.constant 0 : i32
    %c0_i32_0 = arith.constant 0 : i32
    %c0_i32_1 = arith.constant 0 : i32
    return %arg0, %c0_i32, %c0_i32_0 : i32, i32, i32
  }
  func.func @transform_1(%arg0: i32, %arg1: i32) -> (i32, i32, i32) {
    %c0_i32 = arith.constant 0 : i32
    %c0_i32_0 = arith.constant 0 : i32
    %c0_i32_1 = arith.constant 0 : i32
    %c0_i32_2 = arith.constant 0 : i32
    return %c0_i32, %c0_i32_0, %c0_i32_1 : i32, i32, i32
  }
  func.func @transform_2(%arg0: i32, %arg1: i32) -> (i32, i32) {
    %c0_i32 = arith.constant 0 : i32
    %c0_i32_0 = arith.constant 0 : i32
    %c0_i32_1 = arith.constant 0 : i32
    return %c0_i32, %c0_i32_0 : i32, i32
  }
  func.func @transform_3(%arg0: i32, %arg1: i32) -> (i32, i32) {
    %c0_i32 = arith.constant 0 : i32
    %c0_i32_0 = arith.constant 0 : i32
    %c0_i32_1 = arith.constant 0 : i32
    return %c0_i32, %c0_i32_0 : i32, i32
  }
  func.func @transform_4(%arg0: i32, %arg1: i32) -> (i32, i32) {
    %c0_i32 = arith.constant 0 : i32
    %c0_i32_0 = arith.constant 0 : i32
    %c0_i32_1 = arith.constant 0 : i32
    return %c0_i32, %c0_i32_0 : i32, i32
  }
  func.func @transform_5(%arg0: i32, %arg1: i32) -> (i32, i32, i32) {
    %c0_i32 = arith.constant 0 : i32
    %c0_i32_0 = arith.constant 0 : i32
    return %arg0, %arg1, %c0_i32 : i32, i32, i32
  }
  func.func @transform_6(%arg0: i32, %arg1: i32) -> (i32, i32, i32) {
    %c0_i32 = arith.constant 0 : i32
    %c0_i32_0 = arith.constant 0 : i32
    %c0_i32_1 = arith.constant 0 : i32
    return %arg0, %c0_i32, %c0_i32_0 : i32, i32, i32
  }
}

</mosaic_0001>

<llo_original>
// kernel: gradcam_backbone_forward.1
$region0: #{gradcam_backbone_forward.1}
  #allocation0 [shape = 'u32[]', space=smem, size = 0x4, offset = 0x4, fixed_abs, tag = 'smem constant byte address 0x4 - core index']
  #allocation1 [shape = 'u32[144,128]{1,0:T(1,128)}', space=vmem, size = 0x12000, scoped, tag = 'internal scratch']
  #allocation2 [shape = 'f32[1,128]{1,0:T(1,128)}', space=vmem, size = 0x200, scoped, tag = 'scratch operand']
  %s0 = inlined_call_operand.vmem [shape: bf16[2,288,16], index: 0, kind: input, shape index: {}]
  %s1 = inlined_call_operand.vmem [shape: bf16[3,16,128], index: 1, kind: input, shape index: {}]
  %s2 = inlined_call_operand.vmem [shape: f32[1,128], index: 2, kind: input, shape index: {}]
  %s3 = inlined_call_operand.vmem [shape: bf16[128,128], index: 3, kind: input, shape index: {}]
  %s4 = inlined_call_operand.vmem [shape: f32[1,128], index: 4, kind: input, shape index: {}]
  %s5 = inlined_call_operand.vmem [shape: bf16[2,256,128], index: 5, kind: output, shape index: {0}]
  %s6 = inlined_call_operand.hbm [shape: f32[2,1,128], index: 6, kind: output, shape index: {1}]
  %7 = xla_tuple %s5, %s6
  %s8 = sld [smem:[#allocation0]]
  $region69: #{gradcam_backbone_forward.1} parent=0
    _
  %s10 = ssub.s32 1, %s8
  %s11 = scalar_select 0, %s10, %s8
  $region1: #{gradcam_backbone_forward.1} parent=0
    #allocation3 [shape = 'u8[1024]{0}', space=vmem, size = 0x400, scoped, tag = 'output window, operand 1']
    #allocation4 [shape = 's32[2]{0}', space=sflag, size = 0x8, scoped, tag = 'scoped memory for gradcam_backbone_forward.1']
    %12 = vsyncpa [#allocation4], 0
    %s13 = scalar_lea.sflag [#allocation4], 1
    %14 = vsyncpa %s13, 0
    loop: start=0, step=1, limit=6
    $region2: #{gradcam_backbone_forward.1} parent=1 // loop_pre_header
      _
    $region3: #{gradcam_backbone_forward.1} parent=1 // loop_header
      %s16 = sphi 0, %s20
      %p17 = scmp.ge.s32.totalorder %s16, 6
      %s23 = sphi 0, %s35
      %s24 = sphi 0, %s31
      %s25 = sphi 0, %s23
      %s26 = sphi 0, %s24
      %s27 = sphi 0, %s25
      %s28 = sphi 0, %s26
      %s38 = sphi 0, %s40
      %s41 = sphi 0, %s38
      %s42 = sphi 0, %s41
      %s58 = sphi 0, %s42
      %s62 = sphi 0, %s62
      %s64 = sphi 0, %s62
      %s65 = sphi 0, %s64
      %s79 = sphi 0, %s65
      %s83 = sphi 0, %s83
      %s85 = sphi 0, %s83
      %s86 = sphi 0, %s85
      %s100 = sphi 0, %s86
      %s104 = sphi 0, %s104
      %s106 = sphi 0, %s104
      %s107 = sphi 0, %s106
      %s121 = sphi 0, %s107
      %s125 = sphi 0, %s125
      %s127 = sphi 0, %s125
      %s128 = sphi 0, %s127
      %s142 = sphi 0, %s128
      %s150 = sphi 0, %s152
      %s153 = sphi 0, %s150
      %s154 = sphi 0, %s153
      %s170 = sphi 0, %s154
      %s176 = sphi 0, %s178
      %s179 = sphi 0, %s176
      %s180 = sphi 0, %s179
      %s196 = sphi 0, %s180
    $region4: #{gradcam_backbone_forward.1} parent=1 // loop_header_branch
      %19 = sbr.rel (%p17) target = $region8
    $region5: #{gradcam_backbone_forward.1} parent=1 // loop_body
      %s21 = ssub.s32 %s16, 1
      %s22 = ssub.s32 %s16, 2
      %s29 = sadd.s32 1, %s24
      %p30 = scmp.ge.s32.totalorder %s29, 2
      %s31 = scalar_select %p30, 0, %s29
      %s32 = sadd.s32 1, %s23
      %s33 = scalar_select %p30, %s32, %s23
      %p34 = scmp.ge.s32.totalorder %s33, 2
      %s35 = scalar_select %p34, 0, %s33
      %s36 = ssub.s32 %s23, %s35
      %p37 = scmp.eq.s32.totalorder %s36, 0
      %s39 = sadd.s32 %s38, 1
      %s40 = scalar_select %p37, %s38, %s39
      %p43 = pneg %p37
      %p44 = scmp.eq.s32.totalorder %s16, 3
      %p45 = por %p43, %p44
      %p46 = scmp.ne.s32.totalorder %s38, %s41
      %p47 = scmp.eq.s32.totalorder %s16, 0
      %p48 = por %p46, %p47
      %p49 = scmp.ne.s32.totalorder %s38, %s41
      %p50 = scmp.eq.s32.totalorder %s21, 3
      %p51 = por %p49, %p50
      %p52 = scmp.ne.s32.totalorder %s41, %s42
      %p53 = scmp.eq.s32.totalorder %s21, 0
      %p54 = por %p52, %p53
      %p55 = scmp.ne.s32.totalorder %s41, %s42
      %p56 = scmp.eq.s32.totalorder %s22, 3
      %p57 = por %p55, %p56
      %p59 = scmp.ne.s32.totalorder %s42, %s58
      %p60 = scmp.eq.s32.totalorder %s22, 0
      %p61 = por %p59, %p60
      %s63 = sadd.s32 %s62, 1
      %p66 = scmp.eq.s32.totalorder %s16, 3
      %p67 = scmp.ne.s32.totalorder %s62, %s64
      %p68 = scmp.eq.s32.totalorder %s16, 0
      %p69 = por %p67, %p68
      %p70 = scmp.ne.s32.totalorder %s62, %s64
      %p71 = scmp.eq.s32.totalorder %s21, 3
      %p72 = por %p70, %p71
      %p73 = scmp.ne.s32.totalorder %s64, %s65
      %p74 = scmp.eq.s32.totalorder %s21, 0
      %p75 = por %p73, %p74
      %p76 = scmp.ne.s32.totalorder %s64, %s65
      %p77 = scmp.eq.s32.totalorder %s22, 3
      %p78 = por %p76, %p77
      %p80 = scmp.ne.s32.totalorder %s65, %s79
      %p81 = scmp.eq.s32.totalorder %s22, 0
      %p82 = por %p80, %p81
      %s84 = sadd.s32 %s83, 1
      %p87 = scmp.eq.s32.totalorder %s16, 3
      %p88 = scmp.ne.s32.totalorder %s83, %s85
      %p89 = scmp.eq.s32.totalorder %s16, 0
      %p90 = por %p88, %p89
      %p91 = scmp.ne.s32.totalorder %s83, %s85
      %p92 = scmp.eq.s32.totalorder %s21, 3
      %p93 = por %p91, %p92
      %p94 = scmp.ne.s32.totalorder %s85, %s86
      %p95 = scmp.eq.s32.totalorder %s21, 0
      %p96 = por %p94, %p95
      %p97 = scmp.ne.s32.totalorder %s85, %s86
      %p98 = scmp.eq.s32.totalorder %s22, 3
      %p99 = por %p97, %p98
      %p101 = scmp.ne.s32.totalorder %s86, %s100
      %p102 = scmp.eq.s32.totalorder %s22, 0
      %p103 = por %p101, %p102
      %s105 = sadd.s32 %s104, 1
      %p108 = scmp.eq.s32.totalorder %s16, 3
      %p109 = scmp.ne.s32.totalorder %s104, %s106
      %p110 = scmp.eq.s32.totalorder %s16, 0
      %p111 = por %p109, %p110
      %p112 = scmp.ne.s32.totalorder %s104, %s106
      %p113 = scmp.eq.s32.totalorder %s21, 3
      %p114 = por %p112, %p113
      %p115 = scmp.ne.s32.totalorder %s106, %s107
      %p116 = scmp.eq.s32.totalorder %s21, 0
      %p117 = por %p115, %p116
      %p118 = scmp.ne.s32.totalorder %s106, %s107
      %p119 = scmp.eq.s32.totalorder %s22, 3
      %p120 = por %p118, %p119
      %p122 = scmp.ne.s32.totalorder %s107, %s121
      %p123 = scmp.eq.s32.totalorder %s22, 0
      %p124 = por %p122, %p123
      %s126 = sadd.s32 %s125, 1
      %p129 = scmp.eq.s32.totalorder %s16, 3
      %p130 = scmp.ne.s32.totalorder %s125, %s127
      %p131 = scmp.eq.s32.totalorder %s16, 0
      %p132 = por %p130, %p131
      %p133 = scmp.ne.s32.totalorder %s125, %s127
      %p134 = scmp.eq.s32.totalorder %s21, 3
      %p135 = por %p133, %p134
      %p136 = scmp.ne.s32.totalorder %s127, %s128
      %p137 = scmp.eq.s32.totalorder %s21, 0
      %p138 = por %p136, %p137
      %p139 = scmp.ne.s32.totalorder %s127, %s128
      %p140 = scmp.eq.s32.totalorder %s22, 3
      %p141 = por %p139, %p140
      %p143 = scmp.ne.s32.totalorder %s128, %s142
      %p144 = scmp.eq.s32.totalorder %s22, 0
      %p145 = por %p143, %p144
      %s146 = ssub.s32 %s23, %s35
      %s147 = ssub.s32 %s24, %s31
      %s148 = sor.u32 %s146, %s147
      %p149 = scmp.eq.s32.totalorder %s148, 0
      %s151 = sadd.s32 %s150, 1
      %s152 = scalar_select %p149, %s150, %s151
      %p155 = pneg %p149
      %p156 = scmp.eq.s32.totalorder %s16, 3
      %p157 = por %p155, %p156
      %p158 = scmp.ne.s32.totalorder %s150, %s153
      %p159 = scmp.eq.s32.totalorder %s16, 0
      %p160 = por %p158, %p159
      %p161 = scmp.ne.s32.totalorder %s150, %s153
      %p162 = scmp.eq.s32.totalorder %s21, 3
      %p163 = por %p161, %p162
      %p164 = scmp.ne.s32.totalorder %s153, %s154
      %p165 = scmp.eq.s32.totalorder %s21, 0
      %p166 = por %p164, %p165
      %p167 = scmp.ne.s32.totalorder %s153, %s154
      %p168 = scmp.eq.s32.totalorder %s22, 3
      %p169 = por %p167, %p168
      %p171 = scmp.ne.s32.totalorder %s154, %s170
      %p172 = scmp.eq.s32.totalorder %s22, 0
      %p173 = por %p171, %p172
      %s174 = ssub.s32 %s23, %s35
      %p175 = scmp.eq.s32.totalorder %s174, 0
      %s177 = sadd.s32 %s176, 1
      %s178 = scalar_select %p175, %s176, %s177
      %p181 = pneg %p175
      %p182 = scmp.eq.s32.totalorder %s16, 3
      %p183 = por %p181, %p182
      %p184 = scmp.ne.s32.totalorder %s176, %s179
      %p185 = scmp.eq.s32.totalorder %s16, 0
      %p186 = por %p184, %p185
      %p187 = scmp.ne.s32.totalorder %s176, %s179
      %p188 = scmp.eq.s32.totalorder %s21, 3
      %p189 = por %p187, %p188
      %p190 = scmp.ne.s32.totalorder %s179, %s180
      %p191 = scmp.eq.s32.totalorder %s21, 0
      %p192 = por %p190, %p191
      %p193 = scmp.ne.s32.totalorder %s179, %s180
      %p194 = scmp.eq.s32.totalorder %s22, 3
      %p195 = por %p193, %p194
      %p197 = scmp.ne.s32.totalorder %s180, %s196
      %p198 = scmp.eq.s32.totalorder %s22, 0
      %p199 = por %p197, %p198
      %p200 = scmp.le.s32.totalorder 1, %s16
      %p201 = scmp.lt.s32.totalorder %s16, 5
      %p202 = pnand %p200, %p201
      %p203 = pneg %p202
      // Predicated region
      $region9: #{gradcam_backbone_forward.1} parent=5 // pred_check
        _
      $region10: #{gradcam_backbone_forward.1} parent=5 // pred_check_branch
        %205 = sbr.rel (%p202) target = $region12
      $region11: #{gradcam_backbone_forward.1} parent=5 // pred_region
        %s206 = ssub.s32 %s16, 1
        // Predicated region
        $region13: #{gradcam_backbone_forward.1} parent=11 // pred_check
          %p207 = pneg %p75
        $region14: #{gradcam_backbone_forward.1} parent=11 // pred_check_branch
          %209 = sbr.rel (%p207) target = $region16
        $region15: #{gradcam_backbone_forward.1} parent=11 // pred_region
          _
        $region16: #{gradcam_backbone_forward.1} parent=11 // pred_fallthru
          _
        // Predicated region
        $region17: #{gradcam_backbone_forward.1} parent=11 // pred_check
          %p210 = pneg %p96
        $region18: #{gradcam_backbone_forward.1} parent=11 // pred_check_branch
          %212 = sbr.rel (%p210) target = $region20
        $region19: #{gradcam_backbone_forward.1} parent=11 // pred_region
          _
        $region20: #{gradcam_backbone_forward.1} parent=11 // pred_fallthru
          _
        // Predicated region
        $region21: #{gradcam_backbone_forward.1} parent=11 // pred_check
          %p213 = pneg %p117
        $region22: #{gradcam_backbone_forward.1} parent=11 // pred_check_branch
          %215 = sbr.rel (%p213) target = $region24
        $region23: #{gradcam_backbone_forward.1} parent=11 // pred_region
          _
        $region24: #{gradcam_backbone_forward.1} parent=11 // pred_fallthru
          _
        // Predicated region
        $region25: #{gradcam_backbone_forward.1} parent=11 // pred_check
          %p216 = pneg %p138
        $region26: #{gradcam_backbone_forward.1} parent=11 // pred_check_branch
          %218 = sbr.rel (%p216) target = $region28
        $region27: #{gradcam_backbone_forward.1} parent=11 // pred_region
          _
        $region28: #{gradcam_backbone_forward.1} parent=11 // pred_fallthru
          _
      $region12: #{gradcam_backbone_forward.1} parent=5 // pred_fallthru
        _
      %p219 = scmp.lt.s32.totalorder %s16, 4
      // Predicated region
      $region29: #{gradcam_backbone_forward.1} parent=5 // pred_check
        %p220 = pneg %p219
      $region30: #{gradcam_backbone_forward.1} parent=5 // pred_check_branch
        %222 = sbr.rel (%p220) target = $region32
      $region31: #{gradcam_backbone_forward.1} parent=5 // pred_region
        // Predicated region
        $region33: #{gradcam_backbone_forward.1} parent=31 // pred_check
          %p223 = pneg %p48
        $region34: #{gradcam_backbone_forward.1} parent=31 // pred_check_branch
          %225 = sbr.rel (%p223) target = $region36
        $region35: #{gradcam_backbone_forward.1} parent=31 // pred_region
          %p226 = scmp.lt.s32.totalorder %s23, 1
          %s227 = scalar_select %p226, %s23, 1
          %s228 = smul.addr %s227, 36
          %s229 = smul.addr %s228, 4
          %s230 = scalar_lea.vmem %s0, %s229
        $region36: #{gradcam_backbone_forward.1} parent=31 // pred_fallthru
          _
      $region32: #{gradcam_backbone_forward.1} parent=5 // pred_fallthru
        _
      %p231 = scmp.le.s32.totalorder 1, %s16
      %p232 = scmp.lt.s32.totalorder %s16, 5
      %p233 = pnand %p231, %p232
      %p234 = pneg %p233
      // Predicated region
      $region37: #{gradcam_backbone_forward.1} parent=5 // pred_check
        _
      $region38: #{gradcam_backbone_forward.1} parent=5 // pred_check_branch
        %236 = sbr.rel (%p233) target = $region40
      $region39: #{gradcam_backbone_forward.1} parent=5 // pred_region
        %s237 = ssub.s32 %s16, 1
        %p238 = scmp.lt.s32.totalorder %s25, 1
        %s239 = scalar_select %p238, %s25, 1
        %s240 = smul.addr %s239, 36
        %s241 = smul.addr %s240, 4
        %s242 = scalar_lea.vmem %s0, %s241
        %p243 = pneg %p54
        %p244 = pneg %p51
        %p245 = pneg %p75
        %p246 = pneg %p72
        %p247 = pneg %p96
        %p248 = pneg %p93
        %p249 = pneg %p117
        %p250 = pneg %p114
        %p251 = pneg %p138
        %p252 = pneg %p135
        %p253 = pneg %p166
        %p254 = pneg %p163
        %s255 = smul.u32 16, %s26
        %p256 = scmp.lt.s32.totalorder %s25, 1
        %s257 = scalar_select %p256, %s25, 1
        %p258 = scmp.lt.s32.totalorder %s255, 31
        %s259 = scalar_select %p258, %s255, 31
        %s260 = smul.addr %s257, 32
        %s261 = sadd.s32 %s259, %s260
        %s262 = smul.addr %s261, 4
        %s263 = scalar_lea.vmem %s5, %s262
        %p264 = pneg %p192
        %p265 = pneg %p189
        %s266 = sand.u32 %s179, 1
        %s267 = scalar_lea.sflag [#allocation4], %s266
        %s268 = sand.u32 %s179, 1
        %s269 = scalar_lea.vmem [#allocation3], %s268
        %p270 = scmp.lt.s32.totalorder %s25, 1
        %s271 = scalar_select %p270, %s25, 1
        %s272 = smul.addr %s271, 36
        %s273 = smul.addr %s272, 4
        %s274 = scalar_lea.vmem %s0, %s273
        %s275 = smul.u32 16, %s26
        %p276 = scmp.lt.s32.totalorder %s25, 1
        %s277 = scalar_select %p276, %s25, 1
        %p278 = scmp.lt.s32.totalorder %s275, 31
        %s279 = scalar_select %p278, %s275, 31
        %s280 = smul.addr %s277, 32
        %s281 = sadd.s32 %s279, %s280
        %s282 = smul.addr %s281, 4
        %s283 = scalar_lea.vmem %s5, %s282
        %s284 = smul.u32 16, %s26
        %p287 = scmp.eq.s32.totalorder %s26, 0
        // Predicated region
        $region41: #{gradcam_backbone_forward.1} parent=39 // pred_check
          %p288 = pneg %p287
        $region42: #{gradcam_backbone_forward.1} parent=39 // pred_check_branch
          %290 = sbr.rel (%p288) target = $region44
        $region43: #{gradcam_backbone_forward.1} parent=39 // pred_region
          %291 = vst [vmem:[#allocation2] sm:$0x1] 0.0
        $region44: #{gradcam_backbone_forward.1} parent=39 // pred_fallthru
          _
        %s292 = smul.u32 %s26, 128
        %s293 = sshra.s32 %s292, 3
        %s294 = sand.u32 %s292, 7
        %s295 = smul.addr %s293, 4
        %s296 = scalar_lea.vmem %s274, %s295
        %v297 = vld [vmem:[%s296] sm:$0xf]
        %v298 = vld [vmem:[%s296 + $0x4] sm:$0xf]
        %v299 = vld [vmem:[%s296 + $0x8] sm:$0xf]
        %v300 = vld [vmem:[%s296 + $0xc] sm:$0xf]
        %v301 = vld [vmem:[%s296 + $0x10] sm:$0xf]
        %v302 = vld [vmem:[%s296 + $0x14] sm:$0xf]
        %v303 = vld [vmem:[%s296 + $0x18] sm:$0xf]
        %v304 = vld [vmem:[%s296 + $0x1c] sm:$0xf]
        %v305 = vld [vmem:[%s296 + $0x20] sm:$0xf]
        %v306 = vld [vmem:[%s296 + $0x24] sm:$0xf]
        %v307 = vld [vmem:[%s296 + $0x28] sm:$0xf]
        %v308 = vld [vmem:[%s296 + $0x2c] sm:$0xf]
        %v309 = vld [vmem:[%s296 + $0x30] sm:$0xf]
        %v310 = vld [vmem:[%s296 + $0x34] sm:$0xf]
        %v311 = vld [vmem:[%s296 + $0x38] sm:$0xf]
        %v312 = vld [vmem:[%s296 + $0x3c] sm:$0xf]
        %v313 = vld [vmem:[%s1] sm:$0xf]
        %v314 = vld [vmem:[%s1 + $0x4] sm:$0xf]
        %s315 = sadd.s32 %s292, 16
        %s316 = sshra.s32 %s315, 3
        %s317 = sand.u32 %s315, 7
        %s318 = smul.addr %s316, 4
        %s319 = scalar_lea.vmem %s274, %s318
        %v320 = vld [vmem:[%s319] sm:$0xf]
        %v321 = vld [vmem:[%s319 + $0x4] sm:$0xf]
        %v322 = vld [vmem:[%s319 + $0x8] sm:$0xf]
        %v323 = vld [vmem:[%s319 + $0xc] sm:$0xf]
        %v324 = vld [vmem:[%s319 + $0x10] sm:$0xf]
        %v325 = vld [vmem:[%s319 + $0x14] sm:$0xf]
        %v326 = vld [vmem:[%s319 + $0x18] sm:$0xf]
        %v327 = vld [vmem:[%s319 + $0x1c] sm:$0xf]
        %v328 = vld [vmem:[%s319 + $0x20] sm:$0xf]
        %v329 = vld [vmem:[%s319 + $0x24] sm:$0xf]
        %v330 = vld [vmem:[%s319 + $0x28] sm:$0xf]
        %v331 = vld [vmem:[%s319 + $0x2c] sm:$0xf]
        %v332 = vld [vmem:[%s319 + $0x30] sm:$0xf]
        %v333 = vld [vmem:[%s319 + $0x34] sm:$0xf]
        %v334 = vld [vmem:[%s319 + $0x38] sm:$0xf]
        %v335 = vld [vmem:[%s319 + $0x3c] sm:$0xf]
        %s336 = scalar_lea.vmem %s1, 8
        %v337 = vld [vmem:[%s336] sm:$0xf]
        %v338 = vld [vmem:[%s336 + $0x4] sm:$0xf]
        %v355 = vunpack.c.l.b16 %v320
        %v356 = vunpack.c.l.b16 %v321
        %v357 = vunpack.c.l.b16 %v322
        %v358 = vunpack.c.l.b16 %v323
        %v359 = vunpack.c.l.b16 %v324
        %v360 = vunpack.c.l.b16 %v325
        %v361 = vunpack.c.l.b16 %v326
        %v362 = vunpack.c.l.b16 %v327
        %v363 = vunpack.c.l.b16 %v328
        %v364 = vunpack.c.l.b16 %v329
        %v365 = vunpack.c.l.b16 %v330
        %v366 = vunpack.c.l.b16 %v331
        %v367 = vunpack.c.l.b16 %v332
        %v368 = vunpack.c.l.b16 %v333
        %v369 = vunpack.c.l.b16 %v334
        %v370 = vunpack.c.l.b16 %v335
        %v371 = vpack.c.b16 %v356, %v355
        %v372 = vpack.c.b16 %v358, %v357
        %v373 = vpack.c.b16 %v360, %v359
        %v374 = vpack.c.b16 %v362, %v361
        %v375 = vpack.c.b16 %v364, %v363
        %v376 = vpack.c.b16 %v366, %v365
        %v377 = vpack.c.b16 %v368, %v367
        %v378 = vpack.c.b16 %v370, %v369
        %v381 = vunpack.c.l.b16 %v337
        %v382 = vunpack.c.l.b16 %v338
        %v383 = vpack.c.b16 %v382, %v381
        %vm385 = vcmask 130048
        %v387 = vsel %vm385, %v371, 0
        %v390 = vsel %vm385, %v372, 0
        %v393 = vsel %vm385, %v373, 0
        %v396 = vsel %vm385, %v374, 0
        %v399 = vsel %vm385, %v375, 0
        %v402 = vsel %vm385, %v376, 0
        %v405 = vsel %vm385, %v377, 0
        %v408 = vsel %vm385, %v378, 0
        %410 = vmatprep.subr.bf16.mxu0 0
        %411 = vmatpush1.bf16.msra.mxu0 0
        %412 = vmatprep.subr.bf16.mxu0 0
        %413 = vmatpush1.bf16.msra.mxu0 0
        %414 = vmatprep.subr.bf16.mxu0 0
        %415 = vmatpush1.bf16.msra.mxu0 0
        %416 = vmatprep.subr.bf16.mxu0 0
        %417 = vmatpush1.bf16.msra.mxu0 0
        %418 = vmatprep.subr.bf16.mxu0 0
        %419 = vmatpush1.bf16.msra.mxu0 0
        %420 = vmatprep.subr.bf16.mxu0 0
        %421 = vmatpush1.bf16.msra.mxu0 0
        %422 = vmatprep.subr.bf16.mxu0 0
        %423 = vmatpush1.bf16.msra.mxu0 0
        %424 = vmatprep.subr.bf16.mxu0 0
        %425 = vmatpush1.bf16.msra.mxu0 %v383
        %426 = vmatprep.subr.bf16.mxu0 0
        %427 = vmatpush2.bf16.msra.mxu0 0
        %428 = vmatprep.subr.bf16.mxu0 0
        %429 = vmatpush2.bf16.msra.mxu0 0
        %430 = vmatprep.subr.bf16.mxu0 0
        %431 = vmatpush2.bf16.msra.mxu0 0
        %432 = vmatprep.subr.bf16.mxu0 0
        %433 = vmatpush2.bf16.msra.mxu0 0
        %434 = vmatprep.subr.bf16.mxu0 0
        %435 = vmatpush2.bf16.msra.mxu0 0
        %436 = vmatprep.subr.bf16.mxu0 0
        %437 = vmatpush2.bf16.msra.mxu0 0
        %438 = vmatprep.subr.bf16.mxu0 0
        %439 = vmatpush2.bf16.msra.mxu0 0
        %440 = vmatprep.subr.bf16.mxu0 0
        %441 = vmatpush2.bf16.msra.mxu0 0
        %442 = vmatprep.mubr.bf16.mxu0 0
        %443 = vmatmul.mubr.bf16.gmra.mxu0 %v387
        %v444 = vpop.f32.mrf.mxu0
        %v445 = vadd.f32 0.0, %v444
        %v446 = vpop.f32.mrf.mxu0
        %v447 = vpop.f32.mrf.mxu0
        %v448 = vadd.f32 0.0, %v447
        %v449 = vpop.f32.mrf.mxu0
        %450 = vmatprep.mubr.bf16.mxu0 0
        %451 = vmatmul.mubr.bf16.gmra.mxu0 %v390
        %v452 = vpop.f32.mrf.mxu0
        %v453 = vadd.f32 0.0, %v452
        %v454 = vpop.f32.mrf.mxu0
        %v455 = vpop.f32.mrf.mxu0
        %v456 = vadd.f32 0.0, %v455
        %v457 = vpop.f32.mrf.mxu0
        %458 = vmatprep.mubr.bf16.mxu0 0
        %459 = vmatmul.mubr.bf16.gmra.mxu0 %v393
        %v460 = vpop.f32.mrf.mxu0
        %v461 = vadd.f32 0.0, %v460
        %v462 = vpop.f32.mrf.mxu0
        %v463 = vpop.f32.mrf.mxu0
        %v464 = vadd.f32 0.0, %v463
        %v465 = vpop.f32.mrf.mxu0
        %466 = vmatprep.mubr.bf16.mxu0 0
        %467 = vmatmul.mubr.bf16.gmra.mxu0 %v396
        %v468 = vpop.f32.mrf.mxu0
        %v469 = vadd.f32 0.0, %v468
        %v470 = vpop.f32.mrf.mxu0
        %v471 = vpop.f32.mrf.mxu0
        %v472 = vadd.f32 0.0, %v471
        %v473 = vpop.f32.mrf.mxu0
        %474 = vmatprep.mubr.bf16.mxu0 0
        %475 = vmatmul.mubr.bf16.gmra.mxu0 %v399
        %v476 = vpop.f32.mrf.mxu0
        %v477 = vadd.f32 0.0, %v476
        %v478 = vpop.f32.mrf.mxu0
        %v479 = vpop.f32.mrf.mxu0
        %v480 = vadd.f32 0.0, %v479
        %v481 = vpop.f32.mrf.mxu0
        %482 = vmatprep.mubr.bf16.mxu0 0
        %483 = vmatmul.mubr.bf16.gmra.mxu0 %v402
        %v484 = vpop.f32.mrf.mxu0
        %v485 = vadd.f32 0.0, %v484
        %v486 = vpop.f32.mrf.mxu0
        %v487 = vpop.f32.mrf.mxu0
        %v488 = vadd.f32 0.0, %v487
        %v489 = vpop.f32.mrf.mxu0
        %490 = vmatprep.mubr.bf16.mxu0 0
        %491 = vmatmul.mubr.bf16.gmra.mxu0 %v405
        %v492 = vpop.f32.mrf.mxu0
        %v493 = vadd.f32 0.0, %v492
        %v494 = vpop.f32.mrf.mxu0
        %v495 = vpop.f32.mrf.mxu0
        %v496 = vadd.f32 0.0, %v495
        %v497 = vpop.f32.mrf.mxu0
        %498 = vmatprep.mubr.bf16.mxu0 0
        %499 = vmatmul.mubr.bf16.gmra.mxu0 %v408
        %v500 = vpop.f32.mrf.mxu0
        %v501 = vadd.f32 0.0, %v500
        %v502 = vpop.f32.mrf.mxu0
        %v503 = vpop.f32.mrf.mxu0
        %v504 = vadd.f32 0.0, %v503
        %v505 = vpop.f32.mrf.mxu0
        %506 = vdwg.mxu0
        %v523 = vunpack.c.l.b16 %v297
        %v524 = vunpack.c.l.b16 %v298
        %v525 = vunpack.c.l.b16 %v299
        %v526 = vunpack.c.l.b16 %v300
        %v527 = vunpack.c.l.b16 %v301
        %v528 = vunpack.c.l.b16 %v302
        %v529 = vunpack.c.l.b16 %v303
        %v530 = vunpack.c.l.b16 %v304
        %v531 = vunpack.c.l.b16 %v305
        %v532 = vunpack.c.l.b16 %v306
        %v533 = vunpack.c.l.b16 %v307
        %v534 = vunpack.c.l.b16 %v308
        %v535 = vunpack.c.l.b16 %v309
        %v536 = vunpack.c.l.b16 %v310
        %v537 = vunpack.c.l.b16 %v311
        %v538 = vunpack.c.l.b16 %v312
        %v539 = vpack.c.b16 %v524, %v523
        %v540 = vpack.c.b16 %v526, %v525
        %v541 = vpack.c.b16 %v528, %v527
        %v542 = vpack.c.b16 %v530, %v529
        %v543 = vpack.c.b16 %v532, %v531
        %v544 = vpack.c.b16 %v534, %v533
        %v545 = vpack.c.b16 %v536, %v535
        %v546 = vpack.c.b16 %v538, %v537
        %v549 = vunpack.c.l.b16 %v313
        %v550 = vunpack.c.l.b16 %v314
        %v551 = vpack.c.b16 %v550, %v549
        %v554 = vsel %vm385, %v539, 0
        %v557 = vsel %vm385, %v540, 0
        %v560 = vsel %vm385, %v541, 0
        %v563 = vsel %vm385, %v542, 0
        %v566 = vsel %vm385, %v543, 0
        %v569 = vsel %vm385, %v544, 0
        %v572 = vsel %vm385, %v545, 0
        %v575 = vsel %vm385, %v546, 0
        %577 = vmatprep.subr.bf16.mxu0 0
        %578 = vmatpush1.bf16.msra.mxu0 0
        %579 = vmatprep.subr.bf16.mxu0 0
        %580 = vmatpush1.bf16.msra.mxu0 0
        %581 = vmatprep.subr.bf16.mxu0 0
        %582 = vmatpush1.bf16.msra.mxu0 0
        %583 = vmatprep.subr.bf16.mxu0 0
        %584 = vmatpush1.bf16.msra.mxu0 0
        %585 = vmatprep.subr.bf16.mxu0 0
        %586 = vmatpush1.bf16.msra.mxu0 0
        %587 = vmatprep.subr.bf16.mxu0 0
        %588 = vmatpush1.bf16.msra.mxu0 0
        %589 = vmatprep.subr.bf16.mxu0 0
        %590 = vmatpush1.bf16.msra.mxu0 0
        %591 = vmatprep.subr.bf16.mxu0 0
        %592 = vmatpush1.bf16.msra.mxu0 %v551
        %593 = vmatprep.subr.bf16.mxu0 0
        %594 = vmatpush2.bf16.msra.mxu0 0
        %595 = vmatprep.subr.bf16.mxu0 0
        %596 = vmatpush2.bf16.msra.mxu0 0
        %597 = vmatprep.subr.bf16.mxu0 0
        %598 = vmatpush2.bf16.msra.mxu0 0
        %599 = vmatprep.subr.bf16.mxu0 0
        %600 = vmatpush2.bf16.msra.mxu0 0
        %601 = vmatprep.subr.bf16.mxu0 0
        %602 = vmatpush2.bf16.msra.mxu0 0
        %603 = vmatprep.subr.bf16.mxu0 0
        %604 = vmatpush2.bf16.msra.mxu0 0
        %605 = vmatprep.subr.bf16.mxu0 0
        %606 = vmatpush2.bf16.msra.mxu0 0
        %607 = vmatprep.subr.bf16.mxu0 0
        %608 = vmatpush2.bf16.msra.mxu0 0
        %609 = vmatprep.mubr.bf16.mxu0 0
        %610 = vmatmul.mubr.bf16.gmra.mxu0 %v554
        %v611 = vpop.f32.mrf.mxu0
        %v612 = vadd.f32 %v445, %v611
        %v613 = vpop.f32.mrf.mxu0
        %v614 = vpop.f32.mrf.mxu0
        %v615 = vadd.f32 %v448, %v614
        %v616 = vpop.f32.mrf.mxu0
        %617 = vmatprep.mubr.bf16.mxu0 0
        %618 = vmatmul.mubr.bf16.gmra.mxu0 %v557
        %v619 = vpop.f32.mrf.mxu0
        %v620 = vadd.f32 %v453, %v619
        %v621 = vpop.f32.mrf.mxu0
        %v622 = vpop.f32.mrf.mxu0
        %v623 = vadd.f32 %v456, %v622
        %v624 = vpop.f32.mrf.mxu0
        %625 = vmatprep.mubr.bf16.mxu0 0
        %626 = vmatmul.mubr.bf16.gmra.mxu0 %v560
        %v627 = vpop.f32.mrf.mxu0
        %v628 = vadd.f32 %v461, %v627
        %v629 = vpop.f32.mrf.mxu0
        %v630 = vpop.f32.mrf.mxu0
        %v631 = vadd.f32 %v464, %v630
        %v632 = vpop.f32.mrf.mxu0
        %633 = vmatprep.mubr.bf16.mxu0 0
        %634 = vmatmul.mubr.bf16.gmra.mxu0 %v563
        %v635 = vpop.f32.mrf.mxu0
        %v636 = vadd.f32 %v469, %v635
        %v637 = vpop.f32.mrf.mxu0
        %v638 = vpop.f32.mrf.mxu0
        %v639 = vadd.f32 %v472, %v638
        %v640 = vpop.f32.mrf.mxu0
        %641 = vmatprep.mubr.bf16.mxu0 0
        %642 = vmatmul.mubr.bf16.gmra.mxu0 %v566
        %v643 = vpop.f32.mrf.mxu0
        %v644 = vadd.f32 %v477, %v643
        %v645 = vpop.f32.mrf.mxu0
        %v646 = vpop.f32.mrf.mxu0
        %v647 = vadd.f32 %v480, %v646
        %v648 = vpop.f32.mrf.mxu0
        %649 = vmatprep.mubr.bf16.mxu0 0
        %650 = vmatmul.mubr.bf16.gmra.mxu0 %v569
        %v651 = vpop.f32.mrf.mxu0
        %v652 = vadd.f32 %v485, %v651
        %v653 = vpop.f32.mrf.mxu0
        %v654 = vpop.f32.mrf.mxu0
        %v655 = vadd.f32 %v488, %v654
        %v656 = vpop.f32.mrf.mxu0
        %657 = vmatprep.mubr.bf16.mxu0 0
        %658 = vmatmul.mubr.bf16.gmra.mxu0 %v572
        %v659 = vpop.f32.mrf.mxu0
        %v660 = vadd.f32 %v493, %v659
        %v661 = vpop.f32.mrf.mxu0
        %v662 = vpop.f32.mrf.mxu0
        %v663 = vadd.f32 %v496, %v662
        %v664 = vpop.f32.mrf.mxu0
        %665 = vmatprep.mubr.bf16.mxu0 0
        %666 = vmatmul.mubr.bf16.gmra.mxu0 %v575
        %v667 = vpop.f32.mrf.mxu0
        %v668 = vadd.f32 %v501, %v667
        %v669 = vpop.f32.mrf.mxu0
        %v670 = vpop.f32.mrf.mxu0
        %v671 = vadd.f32 %v504, %v670
        %v672 = vpop.f32.mrf.mxu0
        %673 = vdwg.mxu0
        %s674 = sadd.s32 %s292, 32
        %s675 = sshra.s32 %s674, 3
        %s676 = sand.u32 %s674, 7
        %s677 = smul.addr %s675, 4
        %s678 = scalar_lea.vmem %s274, %s677
        %v679 = vld [vmem:[%s678] sm:$0xf]
        %v680 = vld [vmem:[%s678 + $0x4] sm:$0xf]
        %v681 = vld [vmem:[%s678 + $0x8] sm:$0xf]
        %v682 = vld [vmem:[%s678 + $0xc] sm:$0xf]
        %v683 = vld [vmem:[%s678 + $0x10] sm:$0xf]
        %v684 = vld [vmem:[%s678 + $0x14] sm:$0xf]
        %v685 = vld [vmem:[%s678 + $0x18] sm:$0xf]
        %v686 = vld [vmem:[%s678 + $0x1c] sm:$0xf]
        %v687 = vld [vmem:[%s678 + $0x20] sm:$0xf]
        %v688 = vld [vmem:[%s678 + $0x24] sm:$0xf]
        %v689 = vld [vmem:[%s678 + $0x28] sm:$0xf]
        %v690 = vld [vmem:[%s678 + $0x2c] sm:$0xf]
        %v691 = vld [vmem:[%s678 + $0x30] sm:$0xf]
        %v692 = vld [vmem:[%s678 + $0x34] sm:$0xf]
        %v693 = vld [vmem:[%s678 + $0x38] sm:$0xf]
        %v694 = vld [vmem:[%s678 + $0x3c] sm:$0xf]
        %s695 = scalar_lea.vmem %s1, 16
        %v696 = vld [vmem:[%s695] sm:$0xf]
        %v697 = vld [vmem:[%s695 + $0x4] sm:$0xf]
        %v714 = vunpack.c.l.b16 %v679
        %v715 = vunpack.c.l.b16 %v680
        %v716 = vunpack.c.l.b16 %v681
        %v717 = vunpack.c.l.b16 %v682
        %v718 = vunpack.c.l.b16 %v683
        %v719 = vunpack.c.l.b16 %v684
        %v720 = vunpack.c.l.b16 %v685
        %v721 = vunpack.c.l.b16 %v686
        %v722 = vunpack.c.l.b16 %v687
        %v723 = vunpack.c.l.b16 %v688
        %v724 = vunpack.c.l.b16 %v689
        %v725 = vunpack.c.l.b16 %v690
        %v726 = vunpack.c.l.b16 %v691
        %v727 = vunpack.c.l.b16 %v692
        %v728 = vunpack.c.l.b16 %v693
        %v729 = vunpack.c.l.b16 %v694
        %v730 = vpack.c.b16 %v715, %v714
        %v731 = vpack.c.b16 %v717, %v716
        %v732 = vpack.c.b16 %v719, %v718
        %v733 = vpack.c.b16 %v721, %v720
        %v734 = vpack.c.b16 %v723, %v722
        %v735 = vpack.c.b16 %v725, %v724
        %v736 = vpack.c.b16 %v727, %v726
        %v737 = vpack.c.b16 %v729, %v728
        %v740 = vunpack.c.l.b16 %v696
        %v741 = vunpack.c.l.b16 %v697
        %v742 = vpack.c.b16 %v741, %v740
        %v745 = vsel %vm385, %v730, 0
        %v748 = vsel %vm385, %v731, 0
        %v751 = vsel %vm385, %v732, 0
        %v754 = vsel %vm385, %v733, 0
        %v757 = vsel %vm385, %v734, 0
        %v760 = vsel %vm385, %v735, 0
        %v763 = vsel %vm385, %v736, 0
        %v766 = vsel %vm385, %v737, 0
        %768 = vmatprep.subr.bf16.mxu0 0
        %769 = vmatpush1.bf16.msra.mxu0 0
        %770 = vmatprep.subr.bf16.mxu0 0
        %771 = vmatpush1.bf16.msra.mxu0 0
        %772 = vmatprep.subr.bf16.mxu0 0
        %773 = vmatpush1.bf16.msra.mxu0 0
        %774 = vmatprep.subr.bf16.mxu0 0
        %775 = vmatpush1.bf16.msra.mxu0 0
        %776 = vmatprep.subr.bf16.mxu0 0
        %777 = vmatpush1.bf16.msra.mxu0 0
        %778 = vmatprep.subr.bf16.mxu0 0
        %779 = vmatpush1.bf16.msra.mxu0 0
        %780 = vmatprep.subr.bf16.mxu0 0
        %781 = vmatpush1.bf16.msra.mxu0 0
        %782 = vmatprep.subr.bf16.mxu0 0
        %783 = vmatpush1.bf16.msra.mxu0 %v742
        %784 = vmatprep.subr.bf16.mxu0 0
        %785 = vmatpush2.bf16.msra.mxu0 0
        %786 = vmatprep.subr.bf16.mxu0 0
        %787 = vmatpush2.bf16.msra.mxu0 0
        %788 = vmatprep.subr.bf16.mxu0 0
        %789 = vmatpush2.bf16.msra.mxu0 0
        %790 = vmatprep.subr.bf16.mxu0 0
        %791 = vmatpush2.bf16.msra.mxu0 0
        %792 = vmatprep.subr.bf16.mxu0 0
        %793 = vmatpush2.bf16.msra.mxu0 0
        %794 = vmatprep.subr.bf16.mxu0 0
        %795 = vmatpush2.bf16.msra.mxu0 0
        %796 = vmatprep.subr.bf16.mxu0 0
        %797 = vmatpush2.bf16.msra.mxu0 0
        %798 = vmatprep.subr.bf16.mxu0 0
        %799 = vmatpush2.bf16.msra.mxu0 0
        %800 = vmatprep.mubr.bf16.mxu0 0
        %801 = vmatmul.mubr.bf16.gmra.mxu0 %v745
        %v802 = vpop.f32.mrf.mxu0
        %v803 = vadd.f32 0.0, %v802
        %v804 = vpop.f32.mrf.mxu0
        %v805 = vpop.f32.mrf.mxu0
        %v806 = vadd.f32 0.0, %v805
        %v807 = vpop.f32.mrf.mxu0
        %808 = vmatprep.mubr.bf16.mxu0 0
        %809 = vmatmul.mubr.bf16.gmra.mxu0 %v748
        %v810 = vpop.f32.mrf.mxu0
        %v811 = vadd.f32 0.0, %v810
        %v812 = vpop.f32.mrf.mxu0
        %v813 = vpop.f32.mrf.mxu0
        %v814 = vadd.f32 0.0, %v813
        %v815 = vpop.f32.mrf.mxu0
        %816 = vmatprep.mubr.bf16.mxu0 0
        %817 = vmatmul.mubr.bf16.gmra.mxu0 %v751
        %v818 = vpop.f32.mrf.mxu0
        %v819 = vadd.f32 0.0, %v818
        %v820 = vpop.f32.mrf.mxu0
        %v821 = vpop.f32.mrf.mxu0
        %v822 = vadd.f32 0.0, %v821
        %v823 = vpop.f32.mrf.mxu0
        %824 = vmatprep.mubr.bf16.mxu0 0
        %825 = vmatmul.mubr.bf16.gmra.mxu0 %v754
        %v826 = vpop.f32.mrf.mxu0
        %v827 = vadd.f32 0.0, %v826
        %v828 = vpop.f32.mrf.mxu0
        %v829 = vpop.f32.mrf.mxu0
        %v830 = vadd.f32 0.0, %v829
        %v831 = vpop.f32.mrf.mxu0
        %832 = vmatprep.mubr.bf16.mxu0 0
        %833 = vmatmul.mubr.bf16.gmra.mxu0 %v757
        %v834 = vpop.f32.mrf.mxu0
        %v835 = vadd.f32 0.0, %v834
        %v836 = vpop.f32.mrf.mxu0
        %v837 = vpop.f32.mrf.mxu0
        %v838 = vadd.f32 0.0, %v837
        %v839 = vpop.f32.mrf.mxu0
        %840 = vmatprep.mubr.bf16.mxu0 0
        %841 = vmatmul.mubr.bf16.gmra.mxu0 %v760
        %v842 = vpop.f32.mrf.mxu0
        %v843 = vadd.f32 0.0, %v842
        %v844 = vpop.f32.mrf.mxu0
        %v845 = vpop.f32.mrf.mxu0
        %v846 = vadd.f32 0.0, %v845
        %v847 = vpop.f32.mrf.mxu0
        %848 = vmatprep.mubr.bf16.mxu0 0
        %849 = vmatmul.mubr.bf16.gmra.mxu0 %v763
        %v850 = vpop.f32.mrf.mxu0
        %v851 = vadd.f32 0.0, %v850
        %v852 = vpop.f32.mrf.mxu0
        %v853 = vpop.f32.mrf.mxu0
        %v854 = vadd.f32 0.0, %v853
        %v855 = vpop.f32.mrf.mxu0
        %856 = vmatprep.mubr.bf16.mxu0 0
        %857 = vmatmul.mubr.bf16.gmra.mxu0 %v766
        %v858 = vpop.f32.mrf.mxu0
        %v859 = vadd.f32 0.0, %v858
        %v860 = vpop.f32.mrf.mxu0
        %v861 = vpop.f32.mrf.mxu0
        %v862 = vadd.f32 0.0, %v861
        %v863 = vpop.f32.mrf.mxu0
        %864 = vdwg.mxu0
        %v865 = vadd.f32 %v612, %v803
        %v866 = vadd.f32 %v615, %v806
        %v867 = vadd.f32 %v620, %v811
        %v868 = vadd.f32 %v623, %v814
        %v869 = vadd.f32 %v628, %v819
        %v870 = vadd.f32 %v631, %v822
        %v871 = vadd.f32 %v636, %v827
        %v872 = vadd.f32 %v639, %v830
        %v873 = vadd.f32 %v644, %v835
        %v874 = vadd.f32 %v647, %v838
        %v875 = vadd.f32 %v652, %v843
        %v876 = vadd.f32 %v655, %v846
        %v877 = vadd.f32 %v660, %v851
        %v878 = vadd.f32 %v663, %v854
        %v879 = vadd.f32 %v668, %v859
        %v880 = vadd.f32 %v671, %v862
        %v881 = vld [vmem:[%s2] sm:$0x1]
        %v883 = vlaneseq
        %v884 = vshrl.u32 %v883, 7
        %v885 = vsub.s32 0, %v884
        %v886 = vrot.slane %v881, %v885
        %v888 = vadd.f32 %v865, %v886
        %v889 = vadd.f32 %v866, %v886
        %v890 = vadd.f32 %v867, %v886
        %v891 = vadd.f32 %v868, %v886
        %v892 = vadd.f32 %v869, %v886
        %v893 = vadd.f32 %v870, %v886
        %v894 = vadd.f32 %v871, %v886
        %v895 = vadd.f32 %v872, %v886
        %v896 = vadd.f32 %v873, %v886
        %v897 = vadd.f32 %v874, %v886
        %v898 = vadd.f32 %v875, %v886
        %v899 = vadd.f32 %v876, %v886
        %v900 = vadd.f32 %v877, %v886
        %v901 = vadd.f32 %v878, %v886
        %v902 = vadd.f32 %v879, %v886
        %v903 = vadd.f32 %v880, %v886
        %v904 = vmax.f32 %v888, 0.0
        %v905 = vmax.f32 %v889, 0.0
        %v906 = vmax.f32 %v890, 0.0
        %v907 = vmax.f32 %v891, 0.0
        %v908 = vmax.f32 %v892, 0.0
        %v909 = vmax.f32 %v893, 0.0
        %v910 = vmax.f32 %v894, 0.0
        %v911 = vmax.f32 %v895, 0.0
        %v912 = vmax.f32 %v896, 0.0
        %v913 = vmax.f32 %v897, 0.0
        %v914 = vmax.f32 %v898, 0.0
        %v915 = vmax.f32 %v899, 0.0
        %v916 = vmax.f32 %v900, 0.0
        %v917 = vmax.f32 %v901, 0.0
        %v918 = vmax.f32 %v902, 0.0
        %v919 = vmax.f32 %v903, 0.0
        %v920 = vpack.c.bf16 %v905, %v904
        %v921 = vpack.c.bf16 %v907, %v906
        %v922 = vpack.c.bf16 %v909, %v908
        %v923 = vpack.c.bf16 %v911, %v910
        %v924 = vpack.c.bf16 %v913, %v912
        %v925 = vpack.c.bf16 %v915, %v914
        %v926 = vpack.c.bf16 %v917, %v916
        %v927 = vpack.c.bf16 %v919, %v918
        %v936 = vunpack.c.l.b16 %v920
        %v937 = vunpack.c.h.b16 %v920
        %v938 = vunpack.c.l.b16 %v921
        %v939 = vunpack.c.h.b16 %v921
        %v940 = vunpack.c.l.b16 %v922
        %v941 = vunpack.c.h.b16 %v922
        %v942 = vunpack.c.l.b16 %v923
        %v943 = vunpack.c.h.b16 %v923
        %v944 = vunpack.c.l.b16 %v924
        %v945 = vunpack.c.h.b16 %v924
        %v946 = vunpack.c.l.b16 %v925
        %v947 = vunpack.c.h.b16 %v925
        %v948 = vunpack.c.l.b16 %v926
        %v949 = vunpack.c.h.b16 %v926
        %v950 = vunpack.c.l.b16 %v927
        %v951 = vunpack.c.h.b16 %v927
        %v952 = vpack.c.b16 %v936, %v936
        %v953 = vpack.c.b16 %v937, %v937
        %v954 = vpack.c.b16 %v938, %v938
        %v955 = vpack.c.b16 %v939, %v939
        %v956 = vpack.c.b16 %v940, %v940
        %v957 = vpack.c.b16 %v941, %v941
        %v958 = vpack.c.b16 %v942, %v942
        %v959 = vpack.c.b16 %v943, %v943
        %v960 = vpack.c.b16 %v944, %v944
        %v961 = vpack.c.b16 %v945, %v945
        %v962 = vpack.c.b16 %v946, %v946
        %v963 = vpack.c.b16 %v947, %v947
        %v964 = vpack.c.b16 %v948, %v948
        %v965 = vpack.c.b16 %v949, %v949
        %v966 = vpack.c.b16 %v950, %v950
        %v967 = vpack.c.b16 %v951, %v951
        %984 = vst [vmem:[%s283] sm:$0xf] %v952
        %985 = vst [vmem:[%s283 + $0x4] sm:$0xf] %v953
        %986 = vst [vmem:[%s283 + $0x8] sm:$0xf] %v954
        %987 = vst [vmem:[%s283 + $0xc] sm:$0xf] %v955
        %988 = vst [vmem:[%s283 + $0x10] sm:$0xf] %v956
        %989 = vst [vmem:[%s283 + $0x14] sm:$0xf] %v957
        %990 = vst [vmem:[%s283 + $0x18] sm:$0xf] %v958
        %991 = vst [vmem:[%s283 + $0x1c] sm:$0xf] %v959
        %992 = vst [vmem:[%s283 + $0x20] sm:$0xf] %v960
        %993 = vst [vmem:[%s283 + $0x24] sm:$0xf] %v961
        %994 = vst [vmem:[%s283 + $0x28] sm:$0xf] %v962
        %995 = vst [vmem:[%s283 + $0x2c] sm:$0xf] %v963
        %996 = vst [vmem:[%s283 + $0x30] sm:$0xf] %v964
        %997 = vst [vmem:[%s283 + $0x34] sm:$0xf] %v965
        %998 = vst [vmem:[%s283 + $0x38] sm:$0xf] %v966
        %999 = vst [vmem:[%s283 + $0x3c] sm:$0xf] %v967
        %v1000 = vld [vmem:[#allocation2] sm:$0x1]
        %1001 = vmatprep.subr.bf16.mxu0 0
        %1002 = vmatpush1.bf16.msra.mxu0 %v927
        %1003 = vmatprep.subr.bf16.mxu0 0
        %1004 = vmatpush1.bf16.msra.mxu0 %v926
        %1005 = vmatprep.subr.bf16.mxu0 0
        %1006 = vmatpush1.bf16.msra.mxu0 %v925
        %1007 = vmatprep.subr.bf16.mxu0 0
        %1008 = vmatpush1.bf16.msra.mxu0 %v924
        %1009 = vmatprep.subr.bf16.mxu0 0
        %1010 = vmatpush1.bf16.msra.mxu0 %v923
        %1011 = vmatprep.subr.bf16.mxu0 0
        %1012 = vmatpush1.bf16.msra.mxu0 %v922
        %1013 = vmatprep.subr.bf16.mxu0 0
        %1014 = vmatpush1.bf16.msra.mxu0 %v921
        %1015 = vmatprep.subr.bf16.mxu0 0
        %1016 = vmatpush1.bf16.msra.mxu0 %v920
        %1017 = vmatprep.subr.bf16.mxu0 0
        %1018 = vmatpush2.bf16.msra.mxu0 0
        %1019 = vmatprep.subr.bf16.mxu0 0
        %1020 = vmatpush2.bf16.msra.mxu0 0
        %1021 = vmatprep.subr.bf16.mxu0 0
        %1022 = vmatpush2.bf16.msra.mxu0 0
        %1023 = vmatprep.subr.bf16.mxu0 0
        %1024 = vmatpush2.bf16.msra.mxu0 0
        %1025 = vmatprep.subr.bf16.mxu0 0
        %1026 = vmatpush2.bf16.msra.mxu0 0
        %1027 = vmatprep.subr.bf16.mxu0 0
        %1028 = vmatpush2.bf16.msra.mxu0 0
        %1029 = vmatprep.subr.bf16.mxu0 0
        %1030 = vmatpush2.bf16.msra.mxu0 0
        %1031 = vmatprep.subr.bf16.mxu0 0
        %1032 = vmatpush2.bf16.msra.mxu0 0
        %1033 = vmatprep.mubr.bf16.mxu0 0
        %1034 = vmatmul.mubr.bf16.gmra.mxu0 1065369472
        %v1035 = vpop.f32.mrf.mxu0
        %v1036 = vadd.f32 0.0, %v1035
        %v1037 = vpop.f32.mrf.mxu0
        %v1038 = vpop.f32.mrf.mxu0
        %v1039 = vpop.f32.mrf.mxu0
        %1040 = vdwg.mxu0
        %v1041 = vadd.f32 %v1000, %v1036
        %1042 = vst [vmem:[#allocation2] sm:$0x1] %v1041
        %p1043 = scmp.eq.s32.totalorder %s26, 1
        // Predicated region
        $region45: #{gradcam_backbone_forward.1} parent=39 // pred_check
          %p1044 = pneg %p1043
        $region46: #{gradcam_backbone_forward.1} parent=39 // pred_check_branch
          %1046 = sbr.rel (%p1044) target = $region48
        $region47: #{gradcam_backbone_forward.1} parent=39 // pred_region
          %v1047 = vld [vmem:[#allocation2] sm:$0x1]
          %v1048 = vmul.f32 %v1047, 0.00390625
          %v1049 = vpack.c.bf16 %v1048, %v1048
          %v1050 = vld [vmem:[%s3] sm:$0xf]
          %v1051 = vld [vmem:[%s3 + $0x4] sm:$0xf]
          %v1052 = vld [vmem:[%s3 + $0x8] sm:$0xf]
          %v1053 = vld [vmem:[%s3 + $0xc] sm:$0xf]
          %v1054 = vld [vmem:[%s3 + $0x10] sm:$0xf]
          %v1055 = vld [vmem:[%s3 + $0x14] sm:$0xf]
          %v1056 = vld [vmem:[%s3 + $0x18] sm:$0xf]
          %v1057 = vld [vmem:[%s3 + $0x1c] sm:$0xf]
          %v1058 = vld [vmem:[%s3 + $0x20] sm:$0xf]
          %v1059 = vld [vmem:[%s3 + $0x24] sm:$0xf]
          %v1060 = vld [vmem:[%s3 + $0x28] sm:$0xf]
          %v1061 = vld [vmem:[%s3 + $0x2c] sm:$0xf]
          %v1062 = vld [vmem:[%s3 + $0x30] sm:$0xf]
          %v1063 = vld [vmem:[%s3 + $0x34] sm:$0xf]
          %v1064 = vld [vmem:[%s3 + $0x38] sm:$0xf]
          %v1065 = vld [vmem:[%s3 + $0x3c] sm:$0xf]
          %v1066 = vld [vmem:[%s4] sm:$0x1]
          %v1083 = vunpack.c.l.b16 %v1050
          %v1084 = vunpack.c.l.b16 %v1051
          %v1085 = vunpack.c.l.b16 %v1052
          %v1086 = vunpack.c.l.b16 %v1053
          %v1087 = vunpack.c.l.b16 %v1054
          %v1088 = vunpack.c.l.b16 %v1055
          %v1089 = vunpack.c.l.b16 %v1056
          %v1090 = vunpack.c.l.b16 %v1057
          %v1091 = vunpack.c.l.b16 %v1058
          %v1092 = vunpack.c.l.b16 %v1059
          %v1093 = vunpack.c.l.b16 %v1060
          %v1094 = vunpack.c.l.b16 %v1061
          %v1095 = vunpack.c.l.b16 %v1062
          %v1096 = vunpack.c.l.b16 %v1063
          %v1097 = vunpack.c.l.b16 %v1064
          %v1098 = vunpack.c.l.b16 %v1065
          %v1099 = vpack.c.b16 %v1084, %v1083
          %v1100 = vpack.c.b16 %v1086, %v1085
          %v1101 = vpack.c.b16 %v1088, %v1087
          %v1102 = vpack.c.b16 %v1090, %v1089
          %v1103 = vpack.c.b16 %v1092, %v1091
          %v1104 = vpack.c.b16 %v1094, %v1093
          %v1105 = vpack.c.b16 %v1096, %v1095
          %v1106 = vpack.c.b16 %v1098, %v1097
          %1115 = vmatprep.subr.bf16.mxu0 0
          %1116 = vmatpush1.bf16.msra.mxu0 %v1106
          %1117 = vmatprep.subr.bf16.mxu0 0
          %1118 = vmatpush1.bf16.msra.mxu0 %v1105
          %1119 = vmatprep.subr.bf16.mxu0 0
          %1120 = vmatpush1.bf16.msra.mxu0 %v1104
          %1121 = vmatprep.subr.bf16.mxu0 0
          %1122 = vmatpush1.bf16.msra.mxu0 %v1103
          %1123 = vmatprep.subr.bf16.mxu0 0
          %1124 = vmatpush1.bf16.msra.mxu0 %v1102
          %1125 = vmatprep.subr.bf16.mxu0 0
          %1126 = vmatpush1.bf16.msra.mxu0 %v1101
          %1127 = vmatprep.subr.bf16.mxu0 0
          %1128 = vmatpush1.bf16.msra.mxu0 %v1100
          %1129 = vmatprep.subr.bf16.mxu0 0
          %1130 = vmatpush1.bf16.msra.mxu0 %v1099
          %1131 = vmatprep.subr.bf16.mxu0 0
          %1132 = vmatpush2.bf16.msra.mxu0 0
          %1133 = vmatprep.subr.bf16.mxu0 0
          %1134 = vmatpush2.bf16.msra.mxu0 0
          %1135 = vmatprep.subr.bf16.mxu0 0
          %1136 = vmatpush2.bf16.msra.mxu0 0
          %1137 = vmatprep.subr.bf16.mxu0 0
          %1138 = vmatpush2.bf16.msra.mxu0 0
          %1139 = vmatprep.subr.bf16.mxu0 0
          %1140 = vmatpush2.bf16.msra.mxu0 0
          %1141 = vmatprep.subr.bf16.mxu0 0
          %1142 = vmatpush2.bf16.msra.mxu0 0
          %1143 = vmatprep.subr.bf16.mxu0 0
          %1144 = vmatpush2.bf16.msra.mxu0 0
          %1145 = vmatprep.subr.bf16.mxu0 0
          %1146 = vmatpush2.bf16.msra.mxu0 0
          %1147 = vmatprep.mubr.bf16.mxu0 0
          %1148 = vmatmul.mubr.bf16.gmra.mxu0 %v1049
          %v1149 = vpop.f32.mrf.mxu0
          %v1150 = vadd.f32 %v1066, %v1149
          %v1151 = vpop.f32.mrf.mxu0
          %v1152 = vpop.f32.mrf.mxu0
          %v1153 = vpop.f32.mrf.mxu0
          %1154 = vdwg.mxu0
          %1155 = vst [vmem:[%s269] sm:$0x1] %v1150
        $region48: #{gradcam_backbone_forward.1} parent=39 // pred_fallthru
          _
        %s1156 = smul.u32 16, %s26
        %p1157 = scmp.lt.s32.totalorder %s25, 1
        %s1158 = scalar_select %p1157, %s25, 1
        %p1159 = scmp.lt.s32.totalorder %s1156, 31
        %s1160 = scalar_select %p1159, %s1156, 31
        %s1161 = smul.addr %s1158, 32
        %s1162 = sadd.s32 %s1160, %s1161
        %s1163 = smul.addr %s1162, 4
        %s1164 = scalar_lea.vmem %s5, %s1163
        %s1165 = sand.u32 %s179, 1
        %s1166 = scalar_lea.sflag [#allocation4], %s1165
        %s1167 = sand.u32 %s179, 1
        %s1168 = scalar_lea.vmem [#allocation3], %s1167
        // Predicated region
        $region49: #{gradcam_backbone_forward.1} parent=39 // pred_check
          %p1169 = pneg %p163
        $region50: #{gradcam_backbone_forward.1} parent=39 // pred_check_branch
          %1171 = sbr.rel (%p1169) target = $region52
        $region51: #{gradcam_backbone_forward.1} parent=39 // pred_region
          %s1172 = smul.u32 16, %s26
        $region52: #{gradcam_backbone_forward.1} parent=39 // pred_fallthru
          _
        // Predicated region
        $region53: #{gradcam_backbone_forward.1} parent=39 // pred_check
          %p1173 = pneg %p189
        $region54: #{gradcam_backbone_forward.1} parent=39 // pred_check_branch
          %1175 = sbr.rel (%p1173) target = $region56
        $region55: #{gradcam_backbone_forward.1} parent=39 // pred_region
          %s1177 = ssub.s32 16, 16
          %1178 = vsyncadd %s1166, %s1177
          %s1179 = smul.addr %s25, 16
          %s1180 = scalar_lea.hbm %s6, %s1179
          %s1182 = sshll.u32 %s1168, 4
          %s1183 = int_to_ptr.vmem [resolvable:$true] %s1182
          %1185 = dma.vmem_to_hbm [thread:$0]  %s1183, 16, %s1180, %s1166
        $region56: #{gradcam_backbone_forward.1} parent=39 // pred_fallthru
          _
      $region40: #{gradcam_backbone_forward.1} parent=5 // pred_fallthru
        _
      %p1186 = scmp.le.s32.totalorder 2, %s16
      // Predicated region
      $region57: #{gradcam_backbone_forward.1} parent=5 // pred_check
        %p1187 = pneg %p1186
      $region58: #{gradcam_backbone_forward.1} parent=5 // pred_check_branch
        %1189 = sbr.rel (%p1187) target = $region60
      $region59: #{gradcam_backbone_forward.1} parent=5 // pred_region
        %s1190 = ssub.s32 %s16, 2
        // Predicated region
        $region61: #{gradcam_backbone_forward.1} parent=59 // pred_check
          %p1191 = pneg %p169
        $region62: #{gradcam_backbone_forward.1} parent=59 // pred_check_branch
          %1193 = sbr.rel (%p1191) target = $region64
        $region63: #{gradcam_backbone_forward.1} parent=59 // pred_region
          %s1194 = smul.u32 16, %s28
          %p1195 = scmp.lt.s32.totalorder %s27, 1
          %s1196 = scalar_select %p1195, %s27, 1
          %p1197 = scmp.lt.s32.totalorder %s1194, 31
          %s1198 = scalar_select %p1197, %s1194, 31
          %s1199 = smul.addr %s1196, 32
          %s1200 = sadd.s32 %s1198, %s1199
          %s1201 = smul.addr %s1200, 4
          %s1202 = scalar_lea.vmem %s5, %s1201
        $region64: #{gradcam_backbone_forward.1} parent=59 // pred_fallthru
          _
        // Predicated region
        $region65: #{gradcam_backbone_forward.1} parent=59 // pred_check
          %p1203 = pneg %p195
        $region66: #{gradcam_backbone_forward.1} parent=59 // pred_check_branch
          %1205 = sbr.rel (%p1203) target = $region68
        $region67: #{gradcam_backbone_forward.1} parent=59 // pred_region
          %s1206 = sand.u32 %s180, 1
          %s1207 = scalar_lea.sflag [#allocation4], %s1206
          %s1208 = sand.u32 %s180, 1
          %s1209 = scalar_lea.vmem [#allocation3], %s1208
          %1210 = dma.done %s1207, 16
        $region68: #{gradcam_backbone_forward.1} parent=59 // pred_fallthru
          _
      $region60: #{gradcam_backbone_forward.1} parent=5 // pred_fallthru
        _
    $region6: #{gradcam_backbone_forward.1} parent=1 // loop_footer
      %s20 = sadd.s32 1, %s16
    $region7: #{gradcam_backbone_forward.1} parent=1 // loop_footer_branch
      %15 = sbr.rel target = $region3
    $region8: #{gradcam_backbone_forward.1} parent=1 // loop_exit
      _
    %1211 = vsyncpa [#allocation4], 1
    %s1212 = scalar_lea.sflag [#allocation4], 1
    %1213 = vsyncpa %s1212, 1

</llo_original>
